<compile_context>
chip_gen: v7x
topology: tpu7x:2x2x1
jax: 0.10.0
libtpu: 0.0.40
codegen_flags: <defaults>
</compile_context>

<pallas_src>
import functools
from typing import NamedTuple

import jax
import jax.numpy as jnp
import numpy as np
from jax.experimental import pallas as pl
from jax.experimental.pallas import tpu as pltpu


A_PAD = 128   # lane-dense padded width of the softmax output / weight slab
B_PAD = 8     # f32 sublane tile: batch is padded to this so stores are full rows


class SlabLayout(NamedTuple):
    """Static row offsets into the packed weight slab (all multiples of 8)."""
    toep: int   # (CL, 128)  block-Toeplitz conv weight
    w1: int     # (128, 128) dense-1 weight (rows >= CL_out zero)
    w2: int     # (128, 128) dense-2 weight
    wo: int     # (128, 128) output weight (padded logits columns are zero)
    bc: int     # (1, 128)   conv bias tiled in flatten order
    b1: int     # (1, 128)
    b2: int     # (1, 128)
    bo: int     # (1, 128)   padded lanes = -1e30 -> softmax prob 0
    cl: int     # contraction length of the Toeplitz matmul (C * L)
    rows: int   # total slab rows


# ------------------------------ fused kernel --------------------------------

def _agent_fused_kernel(x_ref, w_ref, o_ref, *, off: SlabLayout):
    """Conv1d(+ReLU) as Toeplitz matmul -> Dense(ReLU) x2 -> Linear -> Softmax, fused.

    x_ref : (B_PAD, C*L)   flattened, batch-padded input
    w_ref : (rows, 128)    packed weight slab (see prepare_params)
    o_ref : (B_PAD, 128)   lane-dense softmax output
    """
    # Carve the packed slab with static, tile-aligned slices (no runtime cost).
    w_toep = w_ref[off.toep:off.toep + off.cl, :]     # (CL, 128)
    w1 = w_ref[off.w1:off.w1 + A_PAD, :]              # (128, 128)
    w2 = w_ref[off.w2:off.w2 + A_PAD, :]              # (128, 128)
    wo = w_ref[off.wo:off.wo + A_PAD, :]              # (128, 128)
    bc = w_ref[off.bc:off.bc + 1, :]                  # (1, 128)
    b1 = w_ref[off.b1:off.b1 + 1, :]
    b2 = w_ref[off.b2:off.b2 + 1, :]
    bo = w_ref[off.bo:off.bo + 1, :]

    x = x_ref[...]                                    # (8, CL)

    # Conv1d + bias + ReLU (flatten order already baked into W_toep columns).
    h = jnp.maximum(jnp.dot(x, w_toep, preferred_element_type=jnp.float32) + bc, 0.0)
    # Dense 1 + ReLU (padded lanes stay exactly 0: zero weight cols + zero bias).
    h = jnp.maximum(jnp.dot(h, w1, preferred_element_type=jnp.float32) + b1, 0.0)
    # Dense 2 + ReLU.
    h = jnp.maximum(jnp.dot(h, w2, preferred_element_type=jnp.float32) + b2, 0.0)
    # Output linear; padded logits = -1e30 so their softmax probability is exactly 0.
    s = jnp.dot(h, wo, preferred_element_type=jnp.float32) + bo
    s = s - jnp.max(s, axis=-1, keepdims=True)
    e = jnp.exp(s)
    # Exact divide (pl.reciprocal(approx=True) may exceed the 1e-5 reference tolerance).
    o_ref[...] = e / jnp.sum(e, axis=-1, keepdims=True)


# -------------------------- one-time weight prep -----------------------------

def prepare_params(params, *, n_samples, kernel_size, stride, a_pad=A_PAD):
    """Hoisted out of the forward path: build the block-Toeplitz conv weight and pack
    every weight/bias into a single zero/-1e30-padded (rows, 128) f32 slab."""
    w_conv, b_conv, w1, b1, w2, b2, wo, bo = (np.asarray(p, np.float32) for p in params)
    Co, C, K = w_conv.shape
    L = n_samples
    L_out = (L - K) // stride + 1
    F = Co * L_out                      # flattened conv features, torch order co*L_out + l
    H1, H2 = w1.shape[0], w2.shape[0]
    A = wo.shape[0]
    CL = C * L
    assert w1.shape[1] == F and w2.shape[1] == H1 and wo.shape[1] == H2
    assert A <= a_pad and F <= a_pad and H1 <= a_pad and H2 <= a_pad and CL <= a_pad

    # Block-Toeplitz conv weight: x_flat[b, c*L + pos] @ W_toep -> conv activations in
    # torch-Flatten order, so W1 folds in unmodified (just transposed).
    w_toep = np.zeros((CL, a_pad), np.float32)
    for co in range(Co):
        for l in range(L_out):
            col = co * L_out + l
            for c in range(C):
                for k in range(K):
                    w_toep[c * L + l * stride + k, col] = w_conv[co, c, k]

    # Row offsets (all multiples of 8 so every in-kernel carve is tile-aligned).
    r_toep = 0
    r_w1 = r_toep + CL
    r_w2 = r_w1 + a_pad
    r_wo = r_w2 + a_pad
    r_bc = r_wo + a_pad
    r_b1 = r_bc + 8
    r_b2 = r_b1 + 8
    r_bo = r_b2 + 8
    rows = r_bo + 8
    assert rows % 8 == 0

    slab = np.zeros((rows, a_pad), np.float32)
    slab[r_toep:r_toep + CL, :] = w_toep
    slab[r_w1:r_w1 + F, :H1] = w1.T                    # (56, 32); padded rows/cols zero
    slab[r_w2:r_w2 + H1, :H2] = w2.T                   # (32, 16)
    slab[r_wo:r_wo + H2, :A] = wo.T                    # (16, 3)
    slab[r_bc, :F] = np.repeat(b_conv, L_out)          # conv bias tiled in flatten order
    slab[r_b1, :H1] = b1
    slab[r_b2, :H2] = b2
    slab[r_bo, :] = -1e30                              # padded logits -> softmax prob 0
    slab[r_bo, :A] = bo

    layout = SlabLayout(toep=r_toep, w1=r_w1, w2=r_w2, wo=r_wo,
                        bc=r_bc, b1=r_b1, b2=r_b2, bo=r_bo, cl=CL, rows=rows)
    return jnp.asarray(slab), layout


# ------------------------------ Agent forward --------------------------------

@functools.partial(jax.jit, static_argnames=("layout", "n_actions"))
def agent_forward(x, w_slab, *, layout: SlabLayout, n_actions: int):
    """x: (B, n_features, n_samples) float32 — same NCL layout as the torch module."""
    B = x.shape[0]
    assert B <= B_PAD, "pad path assumes small inference batches (B <= 8)"

    # Free contiguous reshape to the Toeplitz layout + tiny pad of the batch dim to the
    # f32 sublane tile so the kernel writes full (8, 128) rows (no masked stores).
    x_flat = x.reshape(B, -1).astype(jnp.float32)                 # (B, C*L)
    x_in = jnp.pad(x_flat, ((0, B_PAD - B), (0, 0)))              # (8, C*L)

    kern = functools.partial(_agent_fused_kernel, off=layout)
    vmem = pl.BlockSpec(memory_space=pltpu.MemorySpace.VMEM)

    # Single grid-less invocation, whole-array VMEM specs: total footprint ~250 KiB,
    # far under VMEM on every generation, so block tiling would only add overhead.
    # TODO(synk): when batching (B >> a few hundred), add a grid over batch blocks with
    # dimension_semantics=("parallel",) so both v7x TensorCores are used.
    probs_pad = pl.pallas_call(
        kern,
        out_shape=jax.ShapeDtypeStruct((B_PAD, A_PAD), jnp.float32),
        in_specs=[vmem, vmem],
        out_specs=vmem,
    )(x_in, w_slab)

    return probs_pad[:B, :n_actions]     # drop batch padding + padded softmax lanes (exactly 0)


# ------------------------ pure-JAX torch-semantics ref ------------------------

def agent_forward_ref(params, x, *, stride):
    w_conv, b_conv, w1, b1, w2, b2, wo, bo = params
    y = jax.lax.conv_general_dilated(
        x, w_conv, window_strides=(stride,), padding='VALID',
        dimension_numbers=('NCH', 'OIH', 'NCH'))
    y = jax.nn.relu(y + b_conv[None, :, None])
    h = y.reshape(y.shape[0], -1)                       # torch Flatten: (B, C_out*L_out)
    h = jax.nn.relu(h @ w1.T + b1)
    h = jax.nn.relu(h @ w2.T + b2)
    s = h @ wo.T + bo
    return jax.nn.softmax(s, axis=1)


# ----------------------------------- main -------------------------------------

if __name__ == "__main__":
    B = 2
    n_features, n_samples = 4, 16
    Co, K, stride = 8, 4, 2
    L_out = (n_samples - K) // stride + 1               # 7
    H1, H2 = 32, 16
    actions = ['long', 'neutral', 'short']
    A = len(actions)

    key = jax.random.PRNGKey(0)
    ks = jax.random.split(key, 9)
    s = 0.1
    # Deterministic synthetic weights (same shapes nn.Conv1d / nn.Linear would create).
    w_conv = jax.random.normal(ks[0], (Co, n_features, K), jnp.float32) * s
    b_conv = jax.random.normal(ks[1], (Co,), jnp.float32) * s
    w1 = jax.random.normal(ks[2], (H1, Co * L_out), jnp.float32) * s
    b1 = jax.random.normal(ks[3], (H1,), jnp.float32) * s
    w2 = jax.random.normal(ks[4], (H2, H1), jnp.float32) * s
    b2 = jax.random.normal(ks[5], (H2,), jnp.float32) * s
    wo = jax.random.normal(ks[6], (A, H2), jnp.float32) * s
    bo = jax.random.normal(ks[7], (A,), jnp.float32) * s
    params = (w_conv, b_conv, w1, b1, w2, b2, wo, bo)

    x = jax.random.normal(ks[8], (B, n_features, n_samples), jnp.float32)

    # One-time weight re-layout / packing (static for an inference agent).
    w_slab, layout = prepare_params(params, n_samples=n_samples,
                                    kernel_size=K, stride=stride)
    w_slab = jax.block_until_ready(w_slab)

    out = agent_forward(x, w_slab, layout=layout, n_actions=A)
    out = jax.block_until_ready(out)

    ref = jax.block_until_ready(agent_forward_ref(params, x, stride=stride))

    assert out.shape == (B, A)
    np.testing.assert_allclose(np.asarray(out), np.asarray(ref), rtol=1e-5, atol=1e-5)
    # rows of a softmax sum to 1
    np.testing.assert_allclose(np.asarray(out).sum(axis=1), np.ones(B), rtol=1e-5, atol=1e-5)

    print("KERNEL_OK")
</pallas_src>

<mosaic_0001>
module attributes {stable_mosaic.version = 11 : i64} {
  func.func @_agent_fused_kernel(%arg0: memref<8x64xf32, #tpu.memory_space<vmem>>, %arg1: memref<480x128xf32, #tpu.memory_space<vmem>>, %arg2: memref<8x128xf32, #tpu.memory_space<vmem>>) attributes {dimension_semantics = [], scalar_prefetch = 0 : i64, scratch_operands = 0 : i64, tpu.core_type = #tpu.core_type<tc>} {
    %c0 = arith.constant 0 : index
    %c0_0 = arith.constant 0 : index
    %0 = vector.load %arg1[%c0, %c0_0] : memref<480x128xf32, #tpu.memory_space<vmem>>, vector<64x128xf32>
    %c64 = arith.constant 64 : index
    %c0_1 = arith.constant 0 : index
    %1 = vector.load %arg1[%c64, %c0_1] : memref<480x128xf32, #tpu.memory_space<vmem>>, vector<128x128xf32>
    %c192 = arith.constant 192 : index
    %c0_2 = arith.constant 0 : index
    %2 = vector.load %arg1[%c192, %c0_2] : memref<480x128xf32, #tpu.memory_space<vmem>>, vector<128x128xf32>
    %c320 = arith.constant 320 : index
    %c0_3 = arith.constant 0 : index
    %3 = vector.load %arg1[%c320, %c0_3] : memref<480x128xf32, #tpu.memory_space<vmem>>, vector<128x128xf32>
    %c448 = arith.constant 448 : index
    %c0_4 = arith.constant 0 : index
    %4 = vector.load %arg1[%c448, %c0_4] : memref<480x128xf32, #tpu.memory_space<vmem>>, vector<1x128xf32>
    %c456 = arith.constant 456 : index
    %c0_5 = arith.constant 0 : index
    %5 = vector.load %arg1[%c456, %c0_5] : memref<480x128xf32, #tpu.memory_space<vmem>>, vector<1x128xf32>
    %c464 = arith.constant 464 : index
    %c0_6 = arith.constant 0 : index
    %6 = vector.load %arg1[%c464, %c0_6] : memref<480x128xf32, #tpu.memory_space<vmem>>, vector<1x128xf32>
    %c472 = arith.constant 472 : index
    %c0_7 = arith.constant 0 : index
    %7 = vector.load %arg1[%c472, %c0_7] : memref<480x128xf32, #tpu.memory_space<vmem>>, vector<1x128xf32>
    %c0_8 = arith.constant 0 : index
    %c0_9 = arith.constant 0 : index
    %8 = vector.load %arg0[%c0_8, %c0_9] : memref<8x64xf32, #tpu.memory_space<vmem>>, vector<8x64xf32>
    %cst = arith.constant dense<0.000000e+00> : vector<8x128xf32>
    %9 = tpu.matmul %8, %0, %cst {dimension_numbers = #tpu.dot_dimension_numbers<[1], [0], [0], [1], [0, 0, 1, 1], [], []>} : vector<8x64xf32>, vector<64x128xf32>, vector<8x128xf32> -> vector<8x128xf32>
    %10 = vector.broadcast %4 : vector<1x128xf32> to vector<8x128xf32>
    %11 = arith.addf %9, %10 : vector<8x128xf32>
    %cst_10 = arith.constant 0.000000e+00 : f32
    %12 = vector.broadcast %cst_10 : f32 to vector<8x128xf32>
    %13 = arith.maximumf %11, %12 : vector<8x128xf32>
    %cst_11 = arith.constant dense<0.000000e+00> : vector<8x128xf32>
    %14 = tpu.matmul %13, %1, %cst_11 {dimension_numbers = #tpu.dot_dimension_numbers<[1], [0], [0], [1], [0, 0, 1, 1], [], []>} : vector<8x128xf32>, vector<128x128xf32>, vector<8x128xf32> -> vector<8x128xf32>
    %15 = vector.broadcast %5 : vector<1x128xf32> to vector<8x128xf32>
    %16 = arith.addf %14, %15 : vector<8x128xf32>
    %cst_12 = arith.constant 0.000000e+00 : f32
    %17 = vector.broadcast %cst_12 : f32 to vector<8x128xf32>
    %18 = arith.maximumf %16, %17 : vector<8x128xf32>
    %cst_13 = arith.constant dense<0.000000e+00> : vector<8x128xf32>
    %19 = tpu.matmul %18, %2, %cst_13 {dimension_numbers = #tpu.dot_dimension_numbers<[1], [0], [0], [1], [0, 0, 1, 1], [], []>} : vector<8x128xf32>, vector<128x128xf32>, vector<8x128xf32> -> vector<8x128xf32>
    %20 = vector.broadcast %6 : vector<1x128xf32> to vector<8x128xf32>
    %21 = arith.addf %19, %20 : vector<8x128xf32>
    %cst_14 = arith.constant 0.000000e+00 : f32
    %22 = vector.broadcast %cst_14 : f32 to vector<8x128xf32>
    %23 = arith.maximumf %21, %22 : vector<8x128xf32>
    %cst_15 = arith.constant dense<0.000000e+00> : vector<8x128xf32>
    %24 = tpu.matmul %23, %3, %cst_15 {dimension_numbers = #tpu.dot_dimension_numbers<[1], [0], [0], [1], [0, 0, 1, 1], [], []>} : vector<8x128xf32>, vector<128x128xf32>, vector<8x128xf32> -> vector<8x128xf32>
    %25 = vector.broadcast %7 : vector<1x128xf32> to vector<8x128xf32>
    %26 = arith.addf %24, %25 : vector<8x128xf32>
    %cst_16 = arith.constant dense<0xFF800000> : vector<8xf32>
    %27 = vector.multi_reduction <maximumf>, %26, %cst_16 [1] : vector<8x128xf32> to vector<8xf32>
    %28 = vector.shape_cast %27 : vector<8xf32> to vector<8x1xf32>
    %29 = vector.broadcast %28 : vector<8x1xf32> to vector<8x128xf32>
    %30 = arith.subf %26, %29 : vector<8x128xf32>
    %31 = math.exp %30 : vector<8x128xf32>
    %cst_17 = arith.constant dense<0.000000e+00> : vector<8xf32>
    %32 = vector.multi_reduction <add>, %31, %cst_17 [1] : vector<8x128xf32> to vector<8xf32>
    %33 = vector.shape_cast %32 : vector<8xf32> to vector<8x1xf32>
    %34 = vector.broadcast %33 : vector<8x1xf32> to vector<8x128xf32>
    %35 = arith.divf %31, %34 : vector<8x128xf32>
    %c0_18 = arith.constant 0 : index
    %c0_19 = arith.constant 0 : index
    %36 = vector.load %arg2[%c0_18, %c0_19] : memref<8x128xf32, #tpu.memory_space<vmem>>, vector<8x128xf32>
    tpu.vector_store %arg2[%c0_18, %c0_19], %35 {strides = array<i32>} : memref<8x128xf32, #tpu.memory_space<vmem>>, vector<8x128xf32>,
    return
  }
}

</mosaic_0001>

<llo_original>
// kernel: agent_forward.1
$region0: #{agent_forward.1}
  #allocation0 [shape = 'u32[]', space=smem, size = 0x4, offset = 0x4, fixed_abs, tag = 'smem constant byte address 0x4 - core index']
  #allocation1 [shape = 'u32[144,128]{1,0:T(1,128)}', space=vmem, size = 0x12000, scoped, tag = 'internal scratch']
  %s0 = inlined_call_operand.vmem [shape: f32[8,64], index: 0, kind: input, shape index: {}]
  %s1 = inlined_call_operand.hbm [shape: f32[480,128], index: 1, kind: input, shape index: {}]
  %s2 = inlined_call_operand.vmem [shape: f32[8,128], index: 2, kind: output, shape index: {}]
  %s3 = sld [smem:[#allocation0]]
  $region22: #{agent_forward.1} parent=0
    _
  %s5 = ssub.s32 1, %s3
  %s6 = scalar_select 0, %s5, %s3
  $region1: #{agent_forward.1} parent=0
    #allocation2 [shape = 'u8[245760]{0}', space=vmem, size = 0x3c000, scoped, tag = 'input window, operand 1, single buffered']
    #allocation3 [shape = 's32[1]{0}', space=sflag, size = 0x4, scoped, tag = 'scoped memory for agent_forward.1']
    %7 = vsyncpa [#allocation3], 0
    // Predicated region
    $region2: #{agent_forward.1} parent=1 // pred_check
      _
    $region3: #{agent_forward.1} parent=1 // pred_check_branch
      %9 = sbr.rel (0) target = $region5
    $region4: #{agent_forward.1} parent=1 // pred_region
      _
    $region5: #{agent_forward.1} parent=1 // pred_fallthru
      _
    // Predicated region
    $region6: #{agent_forward.1} parent=1 // pred_check
      _
    $region7: #{agent_forward.1} parent=1 // pred_check_branch
      %11 = sbr.rel (0) target = $region9
    $region8: #{agent_forward.1} parent=1 // pred_region
      %s13 = ssub.s32 7680, 7680
      %14 = vsyncadd [#allocation3], %s13
      %s15 = sshll.u32 [#allocation2], 4
      %s16 = int_to_ptr.vmem [resolvable:$true] %s15
      %21 = dma.hbm_to_vmem [thread:$0]  %s1, 7680, %s16, [#allocation3], 128, 128, 8
    $region9: #{agent_forward.1} parent=1 // pred_fallthru
      _
    // Predicated region
    $region10: #{agent_forward.1} parent=1 // pred_check
      _
    $region11: #{agent_forward.1} parent=1 // pred_check_branch
      %23 = sbr.rel (0) target = $region13
    $region12: #{agent_forward.1} parent=1 // pred_region
      %24 = dma.done [#allocation3], 7680
    $region13: #{agent_forward.1} parent=1 // pred_fallthru
      _
    %v25 = vld [vmem:[#allocation2] sm:$0xff]
    %v26 = vld [vmem:[#allocation2 + $0x8] sm:$0xff]
    %v27 = vld [vmem:[#allocation2 + $0x10] sm:$0xff]
    %v28 = vld [vmem:[#allocation2 + $0x18] sm:$0xff]
    %v29 = vld [vmem:[#allocation2 + $0x20] sm:$0xff]
    %v30 = vld [vmem:[#allocation2 + $0x28] sm:$0xff]
    %v31 = vld [vmem:[#allocation2 + $0x30] sm:$0xff]
    %v32 = vld [vmem:[#allocation2 + $0x38] sm:$0xff]
    %v33 = vld [vmem:[#allocation2 + $0x40] sm:$0xff]
    %v34 = vld [vmem:[#allocation2 + $0x48] sm:$0xff]
    %v35 = vld [vmem:[#allocation2 + $0x50] sm:$0xff]
    %v36 = vld [vmem:[#allocation2 + $0x58] sm:$0xff]
    %v37 = vld [vmem:[#allocation2 + $0x60] sm:$0xff]
    %v38 = vld [vmem:[#allocation2 + $0x68] sm:$0xff]
    %v39 = vld [vmem:[#allocation2 + $0x70] sm:$0xff]
    %v40 = vld [vmem:[#allocation2 + $0x78] sm:$0xff]
    %v41 = vld [vmem:[#allocation2 + $0x80] sm:$0xff]
    %v42 = vld [vmem:[#allocation2 + $0x88] sm:$0xff]
    %v43 = vld [vmem:[#allocation2 + $0x90] sm:$0xff]
    %v44 = vld [vmem:[#allocation2 + $0x98] sm:$0xff]
    %v45 = vld [vmem:[#allocation2 + $0xa0] sm:$0xff]
    %v46 = vld [vmem:[#allocation2 + $0xa8] sm:$0xff]
    %v47 = vld [vmem:[#allocation2 + $0xb0] sm:$0xff]
    %v48 = vld [vmem:[#allocation2 + $0xb8] sm:$0xff]
    %v49 = vld [vmem:[#allocation2 + $0xc0] sm:$0xff]
    %v50 = vld [vmem:[#allocation2 + $0xc8] sm:$0xff]
    %v51 = vld [vmem:[#allocation2 + $0xd0] sm:$0xff]
    %v52 = vld [vmem:[#allocation2 + $0xd8] sm:$0xff]
    %v53 = vld [vmem:[#allocation2 + $0xe0] sm:$0xff]
    %v54 = vld [vmem:[#allocation2 + $0xe8] sm:$0xff]
    %v55 = vld [vmem:[#allocation2 + $0xf0] sm:$0xff]
    %v56 = vld [vmem:[#allocation2 + $0xf8] sm:$0xff]
    %v57 = vld [vmem:[#allocation2 + $0x100] sm:$0xff]
    %v58 = vld [vmem:[#allocation2 + $0x108] sm:$0xff]
    %v59 = vld [vmem:[#allocation2 + $0x110] sm:$0xff]
    %v60 = vld [vmem:[#allocation2 + $0x118] sm:$0xff]
    %v61 = vld [vmem:[#allocation2 + $0x120] sm:$0xff]
    %v62 = vld [vmem:[#allocation2 + $0x128] sm:$0xff]
    %v63 = vld [vmem:[#allocation2 + $0x130] sm:$0xff]
    %v64 = vld [vmem:[#allocation2 + $0x138] sm:$0xff]
    %v65 = vld [vmem:[#allocation2 + $0x140] sm:$0xff]
    %v66 = vld [vmem:[#allocation2 + $0x148] sm:$0xff]
    %v67 = vld [vmem:[#allocation2 + $0x150] sm:$0xff]
    %v68 = vld [vmem:[#allocation2 + $0x158] sm:$0xff]
    %v69 = vld [vmem:[#allocation2 + $0x160] sm:$0xff]
    %v70 = vld [vmem:[#allocation2 + $0x168] sm:$0xff]
    %v71 = vld [vmem:[#allocation2 + $0x170] sm:$0xff]
    %v72 = vld [vmem:[#allocation2 + $0x178] sm:$0xff]
    %v73 = vld [vmem:[#allocation2 + $0x180] sm:$0xff]
    %v74 = vld [vmem:[#allocation2 + $0x188] sm:$0xff]
    %v75 = vld [vmem:[#allocation2 + $0x190] sm:$0xff]
    %v76 = vld [vmem:[#allocation2 + $0x198] sm:$0xff]
    %v77 = vld [vmem:[#allocation2 + $0x1a0] sm:$0xff]
    %v78 = vld [vmem:[#allocation2 + $0x1a8] sm:$0xff]
    %v79 = vld [vmem:[#allocation2 + $0x1b0] sm:$0xff]
    %v80 = vld [vmem:[#allocation2 + $0x1b8] sm:$0xff]
    %v81 = vld [vmem:[#allocation2 + $0x1c0] sm:$0x1]
    %v82 = vld [vmem:[#allocation2 + $0x1c8] sm:$0x1]
    %v83 = vld [vmem:[#allocation2 + $0x1d0] sm:$0x1]
    %v84 = vld [vmem:[#allocation2 + $0x1d8] sm:$0x1]
    %v85 = vld [vmem:[%s0] sm:$0xff]
    %v86 = vlaneseq
    %v87 = vshrl.u32 %v86, 7
    %v88 = vsub.s32 0, %v87
    %v89 = vrot.slane %v81, %v88
    %vm90 = vcmask 523264
    %v92 = vsel %vm90, %v85, 0
    %94 = vmatprep.subr.mxu0 0.0
    %95 = vmatpush1.msra.mxu0 %v25
    %96 = vmatprep.subr.mxu0 0.0
    %97 = vmatpush1.msra.mxu0 %v26
    %98 = vmatprep.subr.mxu0 0.0
    %99 = vmatpush1.msra.mxu0 %v27
    %100 = vmatprep.subr.mxu0 0.0
    %101 = vmatpush1.msra.mxu0 %v28
    %102 = vmatprep.subr.mxu0 0.0
    %103 = vmatpush1.msra.mxu0 %v29
    %104 = vmatprep.subr.mxu0 0.0
    %105 = vmatpush1.msra.mxu0 %v30
    %106 = vmatprep.subr.mxu0 0.0
    %107 = vmatpush1.msra.mxu0 %v31
    %108 = vmatprep.subr.mxu0 0.0
    %109 = vmatpush1.msra.mxu0 %v32
    %110 = vmatprep.subr.mxu0 0.0
    %111 = vmatpush1.msra.mxu0 0.0
    %112 = vmatprep.subr.mxu0 0.0
    %113 = vmatpush1.msra.mxu0 0.0
    %114 = vmatprep.subr.mxu0 0.0
    %115 = vmatpush1.msra.mxu0 0.0
    %116 = vmatprep.subr.mxu0 0.0
    %117 = vmatpush1.msra.mxu0 0.0
    %118 = vmatprep.subr.mxu0 0.0
    %119 = vmatpush1.msra.mxu0 0.0
    %120 = vmatprep.subr.mxu0 0.0
    %121 = vmatpush1.msra.mxu0 0.0
    %122 = vmatprep.subr.mxu0 0.0
    %123 = vmatpush1.msra.mxu0 0.0
    %124 = vmatprep.subr.mxu0 0.0
    %125 = vmatpush1.msra.mxu0 0.0
    %126 = vmatprep.subr.mxu0 0.0
    %127 = vmatpush1.msra.mxu0 0.0
    %128 = vmatprep.subr.mxu0 0.0
    %129 = vmatpush1.msra.mxu0 0.0
    %130 = vmatprep.subr.mxu0 0.0
    %131 = vmatpush1.msra.mxu0 0.0
    %132 = vmatprep.subr.mxu0 0.0
    %133 = vmatpush1.msra.mxu0 0.0
    %134 = vmatprep.subr.mxu0 0.0
    %135 = vmatpush1.msra.mxu0 0.0
    %136 = vmatprep.subr.mxu0 0.0
    %137 = vmatpush1.msra.mxu0 0.0
    %138 = vmatprep.subr.mxu0 0.0
    %139 = vmatpush1.msra.mxu0 0.0
    %140 = vmatprep.subr.mxu0 0.0
    %141 = vmatpush1.msra.mxu0 0.0
    %142 = vmatprep.subr.mxu0 0.0
    %143 = vmatpush1.msra.mxu0 0.0
    %144 = vmatprep.subr.mxu0 0.0
    %145 = vmatpush1.msra.mxu0 0.0
    %146 = vmatprep.subr.mxu0 0.0
    %147 = vmatpush1.msra.mxu0 0.0
    %148 = vmatprep.subr.mxu0 0.0
    %149 = vmatpush1.msra.mxu0 0.0
    %150 = vmatprep.subr.mxu0 0.0
    %151 = vmatpush1.msra.mxu0 0.0
    %152 = vmatprep.subr.mxu0 0.0
    %153 = vmatpush1.msra.mxu0 0.0
    %154 = vmatprep.subr.mxu0 0.0
    %155 = vmatpush1.msra.mxu0 0.0
    %156 = vmatprep.subr.mxu0 0.0
    %157 = vmatpush1.msra.mxu0 0.0
    %158 = vmatprep.mubr.f32.mxu0 0.0
    %159 = vmatmul.mubr.f32.gmra.mrb[0].mxu0 %v92
    %v160 = vpop.f32.mrb[0].mxu0
    %v161 = vadd.f32 %v89, %v160
    %v162 = vpop.f32.mrb[0].mxu0
    %163 = vdwg.mxu0
    %v164 = vmax.f32 %v161, 0.0
    %v165 = vlaneseq
    %v166 = vshrl.u32 %v165, 7
    %v167 = vsub.s32 0, %v166
    %v168 = vrot.slane %v82, %v167
    %169 = vmatprep.subr.mxu0 0.0
    %170 = vmatpush1.msra.mxu0 %v33
    %171 = vmatprep.subr.mxu0 0.0
    %172 = vmatpush1.msra.mxu0 %v34
    %173 = vmatprep.subr.mxu0 0.0
    %174 = vmatpush1.msra.mxu0 %v35
    %175 = vmatprep.subr.mxu0 0.0
    %176 = vmatpush1.msra.mxu0 %v36
    %177 = vmatprep.subr.mxu0 0.0
    %178 = vmatpush1.msra.mxu0 %v37
    %179 = vmatprep.subr.mxu0 0.0
    %180 = vmatpush1.msra.mxu0 %v38
    %181 = vmatprep.subr.mxu0 0.0
    %182 = vmatpush1.msra.mxu0 %v39
    %183 = vmatprep.subr.mxu0 0.0
    %184 = vmatpush1.msra.mxu0 %v40
    %185 = vmatprep.subr.mxu0 0.0
    %186 = vmatpush1.msra.mxu0 %v41
    %187 = vmatprep.subr.mxu0 0.0
    %188 = vmatpush1.msra.mxu0 %v42
    %189 = vmatprep.subr.mxu0 0.0
    %190 = vmatpush1.msra.mxu0 %v43
    %191 = vmatprep.subr.mxu0 0.0
    %192 = vmatpush1.msra.mxu0 %v44
    %193 = vmatprep.subr.mxu0 0.0
    %194 = vmatpush1.msra.mxu0 %v45
    %195 = vmatprep.subr.mxu0 0.0
    %196 = vmatpush1.msra.mxu0 %v46
    %197 = vmatprep.subr.mxu0 0.0
    %198 = vmatpush1.msra.mxu0 %v47
    %199 = vmatprep.subr.mxu0 0.0
    %200 = vmatpush1.msra.mxu0 %v48
    %201 = vmatprep.subr.mxu0 0.0
    %202 = vmatpush1.msra.mxu0 0.0
    %203 = vmatprep.subr.mxu0 0.0
    %204 = vmatpush1.msra.mxu0 0.0
    %205 = vmatprep.subr.mxu0 0.0
    %206 = vmatpush1.msra.mxu0 0.0
    %207 = vmatprep.subr.mxu0 0.0
    %208 = vmatpush1.msra.mxu0 0.0
    %209 = vmatprep.subr.mxu0 0.0
    %210 = vmatpush1.msra.mxu0 0.0
    %211 = vmatprep.subr.mxu0 0.0
    %212 = vmatpush1.msra.mxu0 0.0
    %213 = vmatprep.subr.mxu0 0.0
    %214 = vmatpush1.msra.mxu0 0.0
    %215 = vmatprep.subr.mxu0 0.0
    %216 = vmatpush1.msra.mxu0 0.0
    %217 = vmatprep.subr.mxu0 0.0
    %218 = vmatpush1.msra.mxu0 0.0
    %219 = vmatprep.subr.mxu0 0.0
    %220 = vmatpush1.msra.mxu0 0.0
    %221 = vmatprep.subr.mxu0 0.0
    %222 = vmatpush1.msra.mxu0 0.0
    %223 = vmatprep.subr.mxu0 0.0
    %224 = vmatpush1.msra.mxu0 0.0
    %225 = vmatprep.subr.mxu0 0.0
    %226 = vmatpush1.msra.mxu0 0.0
    %227 = vmatprep.subr.mxu0 0.0
    %228 = vmatpush1.msra.mxu0 0.0
    %229 = vmatprep.subr.mxu0 0.0
    %230 = vmatpush1.msra.mxu0 0.0
    %231 = vmatprep.subr.mxu0 0.0
    %232 = vmatpush1.msra.mxu0 0.0
    %233 = vmatprep.mubr.f32.mxu0 0.0
    %234 = vmatmul.mubr.f32.gmra.mrb[0].mxu0 %v164
    %v235 = vpop.f32.mrb[0].mxu0
    %v236 = vadd.f32 %v168, %v235
    %v237 = vpop.f32.mrb[0].mxu0
    %238 = vdwg.mxu0
    %v239 = vmax.f32 %v236, 0.0
    %v240 = vlaneseq
    %v241 = vshrl.u32 %v240, 7
    %v242 = vsub.s32 0, %v241
    %v243 = vrot.slane %v83, %v242
    %244 = vmatprep.subr.mxu0 0.0
    %245 = vmatpush1.msra.mxu0 %v49
    %246 = vmatprep.subr.mxu0 0.0
    %247 = vmatpush1.msra.mxu0 %v50
    %248 = vmatprep.subr.mxu0 0.0
    %249 = vmatpush1.msra.mxu0 %v51
    %250 = vmatprep.subr.mxu0 0.0
    %251 = vmatpush1.msra.mxu0 %v52
    %252 = vmatprep.subr.mxu0 0.0
    %253 = vmatpush1.msra.mxu0 %v53
    %254 = vmatprep.subr.mxu0 0.0
    %255 = vmatpush1.msra.mxu0 %v54
    %256 = vmatprep.subr.mxu0 0.0
    %257 = vmatpush1.msra.mxu0 %v55
    %258 = vmatprep.subr.mxu0 0.0
    %259 = vmatpush1.msra.mxu0 %v56
    %260 = vmatprep.subr.mxu0 0.0
    %261 = vmatpush1.msra.mxu0 %v57
    %262 = vmatprep.subr.mxu0 0.0
    %263 = vmatpush1.msra.mxu0 %v58
    %264 = vmatprep.subr.mxu0 0.0
    %265 = vmatpush1.msra.mxu0 %v59
    %266 = vmatprep.subr.mxu0 0.0
    %267 = vmatpush1.msra.mxu0 %v60
    %268 = vmatprep.subr.mxu0 0.0
    %269 = vmatpush1.msra.mxu0 %v61
    %270 = vmatprep.subr.mxu0 0.0
    %271 = vmatpush1.msra.mxu0 %v62
    %272 = vmatprep.subr.mxu0 0.0
    %273 = vmatpush1.msra.mxu0 %v63
    %274 = vmatprep.subr.mxu0 0.0
    %275 = vmatpush1.msra.mxu0 %v64
    %276 = vmatprep.subr.mxu0 0.0
    %277 = vmatpush1.msra.mxu0 0.0
    %278 = vmatprep.subr.mxu0 0.0
    %279 = vmatpush1.msra.mxu0 0.0
    %280 = vmatprep.subr.mxu0 0.0
    %281 = vmatpush1.msra.mxu0 0.0
    %282 = vmatprep.subr.mxu0 0.0
    %283 = vmatpush1.msra.mxu0 0.0
    %284 = vmatprep.subr.mxu0 0.0
    %285 = vmatpush1.msra.mxu0 0.0
    %286 = vmatprep.subr.mxu0 0.0
    %287 = vmatpush1.msra.mxu0 0.0
    %288 = vmatprep.subr.mxu0 0.0
    %289 = vmatpush1.msra.mxu0 0.0
    %290 = vmatprep.subr.mxu0 0.0
    %291 = vmatpush1.msra.mxu0 0.0
    %292 = vmatprep.subr.mxu0 0.0
    %293 = vmatpush1.msra.mxu0 0.0
    %294 = vmatprep.subr.mxu0 0.0
    %295 = vmatpush1.msra.mxu0 0.0
    %296 = vmatprep.subr.mxu0 0.0
    %297 = vmatpush1.msra.mxu0 0.0
    %298 = vmatprep.subr.mxu0 0.0
    %299 = vmatpush1.msra.mxu0 0.0
    %300 = vmatprep.subr.mxu0 0.0
    %301 = vmatpush1.msra.mxu0 0.0
    %302 = vmatprep.subr.mxu0 0.0
    %303 = vmatpush1.msra.mxu0 0.0
    %304 = vmatprep.subr.mxu0 0.0
    %305 = vmatpush1.msra.mxu0 0.0
    %306 = vmatprep.subr.mxu0 0.0
    %307 = vmatpush1.msra.mxu0 0.0
    %308 = vmatprep.mubr.f32.mxu0 0.0
    %309 = vmatmul.mubr.f32.gmra.mrb[0].mxu0 %v239
    %v310 = vpop.f32.mrb[0].mxu0
    %v311 = vadd.f32 %v243, %v310
    %v312 = vpop.f32.mrb[0].mxu0
    %313 = vdwg.mxu0
    %v314 = vmax.f32 %v311, 0.0
    %v315 = vlaneseq
    %v316 = vshrl.u32 %v315, 7
    %v317 = vsub.s32 0, %v316
    %v318 = vrot.slane %v84, %v317
    %319 = vmatprep.subr.mxu0 0.0
    %320 = vmatpush1.msra.mxu0 %v65
    %321 = vmatprep.subr.mxu0 0.0
    %322 = vmatpush1.msra.mxu0 %v66
    %323 = vmatprep.subr.mxu0 0.0
    %324 = vmatpush1.msra.mxu0 %v67
    %325 = vmatprep.subr.mxu0 0.0
    %326 = vmatpush1.msra.mxu0 %v68
    %327 = vmatprep.subr.mxu0 0.0
    %328 = vmatpush1.msra.mxu0 %v69
    %329 = vmatprep.subr.mxu0 0.0
    %330 = vmatpush1.msra.mxu0 %v70
    %331 = vmatprep.subr.mxu0 0.0
    %332 = vmatpush1.msra.mxu0 %v71
    %333 = vmatprep.subr.mxu0 0.0
    %334 = vmatpush1.msra.mxu0 %v72
    %335 = vmatprep.subr.mxu0 0.0
    %336 = vmatpush1.msra.mxu0 %v73
    %337 = vmatprep.subr.mxu0 0.0
    %338 = vmatpush1.msra.mxu0 %v74
    %339 = vmatprep.subr.mxu0 0.0
    %340 = vmatpush1.msra.mxu0 %v75
    %341 = vmatprep.subr.mxu0 0.0
    %342 = vmatpush1.msra.mxu0 %v76
    %343 = vmatprep.subr.mxu0 0.0
    %344 = vmatpush1.msra.mxu0 %v77
    %345 = vmatprep.subr.mxu0 0.0
    %346 = vmatpush1.msra.mxu0 %v78
    %347 = vmatprep.subr.mxu0 0.0
    %348 = vmatpush1.msra.mxu0 %v79
    %349 = vmatprep.subr.mxu0 0.0
    %350 = vmatpush1.msra.mxu0 %v80
    %351 = vmatprep.subr.mxu0 0.0
    %352 = vmatpush1.msra.mxu0 0.0
    %353 = vmatprep.subr.mxu0 0.0
    %354 = vmatpush1.msra.mxu0 0.0
    %355 = vmatprep.subr.mxu0 0.0
    %356 = vmatpush1.msra.mxu0 0.0
    %357 = vmatprep.subr.mxu0 0.0
    %358 = vmatpush1.msra.mxu0 0.0
    %359 = vmatprep.subr.mxu0 0.0
    %360 = vmatpush1.msra.mxu0 0.0
    %361 = vmatprep.subr.mxu0 0.0
    %362 = vmatpush1.msra.mxu0 0.0
    %363 = vmatprep.subr.mxu0 0.0
    %364 = vmatpush1.msra.mxu0 0.0
    %365 = vmatprep.subr.mxu0 0.0
    %366 = vmatpush1.msra.mxu0 0.0
    %367 = vmatprep.subr.mxu0 0.0
    %368 = vmatpush1.msra.mxu0 0.0
    %369 = vmatprep.subr.mxu0 0.0
    %370 = vmatpush1.msra.mxu0 0.0
    %371 = vmatprep.subr.mxu0 0.0
    %372 = vmatpush1.msra.mxu0 0.0
    %373 = vmatprep.subr.mxu0 0.0
    %374 = vmatpush1.msra.mxu0 0.0
    %375 = vmatprep.subr.mxu0 0.0
    %376 = vmatpush1.msra.mxu0 0.0
    %377 = vmatprep.subr.mxu0 0.0
    %378 = vmatpush1.msra.mxu0 0.0
    %379 = vmatprep.subr.mxu0 0.0
    %380 = vmatpush1.msra.mxu0 0.0
    %381 = vmatprep.subr.mxu0 0.0
    %382 = vmatpush1.msra.mxu0 0.0
    %383 = vmatprep.mubr.f32.mxu0 0.0
    %384 = vmatmul.mubr.f32.gmra.mrb[0].mxu0 %v314
    %v385 = vpop.f32.mrb[0].mxu0
    %v386 = vadd.f32 %v318, %v385
    %v387 = vpop.f32.mrb[0].mxu0
    %388 = vdwg.mxu0
    %389 = vmax.xlane.f32.xlu0 %v386
    %v390 = vpop.xlane.xlu0 %389
    %v391 = vsub.f32 %v386, %v390
    %v392 = vmul.f32 %v391, 1.442695
    %v393 = vpow.pop %v392
    %394 = vadd.xlane.f32.xlu0 %v393
    %v395 = vpop.xlane.xlu0 %394
    %v396 = vrcp.pop %v395
    %v397 = vmul.f32 %v393, %v396
    %398 = vst [vmem:[%s2] sm:$0xff] %v397
    // Predicated region
    $region14: #{agent_forward.1} parent=1 // pred_check
      _
    $region15: #{agent_forward.1} parent=1 // pred_check_branch
      %400 = sbr.rel (0) target = $region17
    $region16: #{agent_forward.1} parent=1 // pred_region
      _
    $region17: #{agent_forward.1} parent=1 // pred_fallthru
      _
    // Predicated region
    $region18: #{agent_forward.1} parent=1 // pred_check
      _
    $region19: #{agent_forward.1} parent=1 // pred_check_branch
      %402 = sbr.rel (0) target = $region21
    $region20: #{agent_forward.1} parent=1 // pred_region
      _
    $region21: #{agent_forward.1} parent=1 // pred_fallthru
      _
    %403 = vsyncpa [#allocation3], 1

</llo_original>
